<compile_context>
chip_gen: v6e
topology: v6e:2x2x1
jax: 0.10.0
libtpu: 0.0.40
codegen_flags: <defaults>
</compile_context>

<pallas_src>
import functools

import jax
import jax.numpy as jnp
from jax.experimental import pallas as pl
from jax.experimental.pallas import tpu as pltpu


def _se_kernel(x_ref, w1_ref, w2_ref, o_ref, *, inv_hw):
    # x_ref: (NB, C, HW) activation-dtype block; w1_ref: (SE, C) f32;
    # w2_ref: (C, SE) f32; o_ref: (NB, C, HW).
    x = x_ref[...]
    x32 = x.astype(jnp.float32)                              # upcast in vregs only

    # AdaptiveAvgPool2d(1): masked lane reduction over HW, scaled by 1/(H*W).
    pooled = jnp.sum(x32, axis=-1) * inv_hw                  # (NB, C) f32

    # Squeeze/excite gate, batched over NB (small MXU matmuls, f32 accumulate).
    s1 = jnp.einsum("nc,sc->ns", pooled, w1_ref[...],
                    preferred_element_type=jnp.float32)      # (NB, SE)
    s1 = jnp.maximum(s1, 0.0)                                # ReLU
    s2 = jnp.einsum("ns,cs->nc", s1, w2_ref[...],
                    preferred_element_type=jnp.float32)      # (NB, C)
    gate = jax.nn.sigmoid(s2)                                # (NB, C)

    # Channel-wise rescale, broadcast over the spatial lanes.
    o_ref[...] = (x32 * gate[:, :, None]).astype(o_ref.dtype)


def se_module_pallas(x_nchw, w1_full, w2_full, *, max_block_bytes=4 * 1024 * 1024):
    """SEModule forward.

    x_nchw: (N, C, H, W); w1_full: (SE, C, 3, 3); w2_full: (C, SE, 3, 3).
    Streams x in its native dtype (f32 or bf16); gate math runs in f32.
    """
    N, C, H, W = x_nchw.shape
    SE = w1_full.shape[0]
    HW = H * W
    dtype = x_nchw.dtype

    # Free contiguous merge of the trailing dims -- no data movement.
    x_flat = x_nchw.reshape(N, C, HW)

    # Centre taps of the 3x3 convs (1x1 zero-padded input -> only centre tap).
    w1_c = w1_full[:, :, 1, 1].astype(jnp.float32)           # (SE, C)
    w2_c = w2_full[:, :, 1, 1].astype(jnp.float32)           # (C, SE)

    # Batch elements per grid step, sized from the VMEM-padded footprint
    # (lane dim rounds up to 128, sublane dim to 8).  Double-buffered in+out
    # ~= 4x block bytes, comfortably inside the 32 MiB scoped-VMEM limit.
    hw_vmem = ((HW + 127) // 128) * 128
    c_vmem = ((C + 7) // 8) * 8
    bytes_per_batch = c_vmem * hw_vmem * jnp.dtype(dtype).itemsize
    NB = max(1, min(N, max_block_bytes // max(1, bytes_per_batch)))
    steps = pl.cdiv(N, NB)                                   # ragged last block OK

    kernel = functools.partial(_se_kernel, inv_hw=1.0 / float(HW))

    out = pl.pallas_call(
        kernel,
        out_shape=jax.ShapeDtypeStruct((N, C, HW), dtype),
        grid_spec=pltpu.PrefetchScalarGridSpec(
            num_scalar_prefetch=0,
            grid=(steps,),
            in_specs=[
                pl.BlockSpec((NB, C, HW), lambda n: (n, 0, 0)),
                pl.BlockSpec((SE, C), lambda n: (0, 0)),     # resident, fetched once
                pl.BlockSpec((C, SE), lambda n: (0, 0)),     # resident, fetched once
            ],
            out_specs=pl.BlockSpec((NB, C, HW), lambda n: (n, 0, 0)),
        ),
        compiler_params=pltpu.CompilerParams(
            dimension_semantics=("parallel",),
            vmem_limit_bytes=32 * 1024 * 1024,
        ),
    )(x_flat, w1_c, w2_c)

    return out.reshape(N, C, H, W)


def se_module_ref(x_nchw, w1_full, w2_full):
    """Pure-JAX reference implementing the exact PyTorch forward."""
    pooled = jnp.mean(x_nchw.astype(jnp.float32), axis=(2, 3), keepdims=True)
    y1 = jax.lax.conv_general_dilated(
        pooled, w1_full.astype(jnp.float32), window_strides=(1, 1),
        padding=((1, 1), (1, 1)), dimension_numbers=("NCHW", "OIHW", "NCHW"))
    y1 = jnp.maximum(y1, 0.0)
    y2 = jax.lax.conv_general_dilated(
        y1, w2_full.astype(jnp.float32), window_strides=(1, 1),
        padding=((1, 1), (1, 1)), dimension_numbers=("NCHW", "OIHW", "NCHW"))
    y2 = jax.nn.sigmoid(y2)
    return y2 * x_nchw.astype(jnp.float32)


if __name__ == "__main__":
    key = jax.random.PRNGKey(0)
    kx, k1, k2, kx2, k3, k4, kx3, k5, k6 = jax.random.split(key, 9)

    # Test 1: lane-aligned spatial (HW = 256).
    N, C, H, W, SE = 2, 16, 16, 16, 8
    x = jax.random.normal(kx, (N, C, H, W), dtype=jnp.float32)
    w1 = jax.random.normal(k1, (SE, C, 3, 3), dtype=jnp.float32) * 0.1
    w2 = jax.random.normal(k2, (C, SE, 3, 3), dtype=jnp.float32) * 0.1
    out = jax.block_until_ready(se_module_pallas(x, w1, w2))
    ref = jax.block_until_ready(se_module_ref(x, w1, w2))
    assert out.shape == (N, C, H, W)
    assert jnp.allclose(out, ref, atol=1e-5, rtol=1e-5), "mismatch (f32, aligned)"

    # Test 2: odd spatial extent (HW = 63, masked lane tail handled by Mosaic).
    N2, C2, H2, W2, SE2 = 3, 8, 7, 9, 4
    x2 = jax.random.normal(kx2, (N2, C2, H2, W2), dtype=jnp.float32)
    w1b = jax.random.normal(k3, (SE2, C2, 3, 3), dtype=jnp.float32) * 0.1
    w2b = jax.random.normal(k4, (C2, SE2, 3, 3), dtype=jnp.float32) * 0.1
    out2 = jax.block_until_ready(se_module_pallas(x2, w1b, w2b))
    ref2 = jax.block_until_ready(se_module_ref(x2, w1b, w2b))
    assert out2.shape == (N2, C2, H2, W2)
    assert jnp.allclose(out2, ref2, atol=1e-5, rtol=1e-5), "mismatch (odd HW)"

    # Test 3: ragged batch grid (N=5, NB forced to 2 -> 3 steps, last one padded).
    N3, C3, H3, W3, SE3 = 5, 8, 8, 8, 4
    x3 = jax.random.normal(kx3, (N3, C3, H3, W3), dtype=jnp.float32)
    w1c = jax.random.normal(k5, (SE3, C3, 3, 3), dtype=jnp.float32) * 0.1
    w2c = jax.random.normal(k6, (C3, SE3, 3, 3), dtype=jnp.float32) * 0.1
    out3 = jax.block_until_ready(
        se_module_pallas(x3, w1c, w2c, max_block_bytes=2 * 8 * 128 * 4))
    ref3 = jax.block_until_ready(se_module_ref(x3, w1c, w2c))
    assert out3.shape == (N3, C3, H3, W3)
    assert jnp.allclose(out3, ref3, atol=1e-5, rtol=1e-5), "mismatch (ragged batch)"

    print("KERNEL_OK")
</pallas_src>

<mosaic_0001>
module attributes {stable_mosaic.version = 11 : i64} {
  func.func @_se_kernel(%arg0: i32, %arg1: memref<2x16x256xf32, #tpu.memory_space<vmem>>, %arg2: memref<8x16xf32, #tpu.memory_space<vmem>>, %arg3: memref<16x8xf32, #tpu.memory_space<vmem>>, %arg4: memref<2x16x256xf32, #tpu.memory_space<vmem>>) attributes {dimension_semantics = [#tpu.dimension_semantics<parallel>], iteration_bounds = array<i64: 1>, scalar_prefetch = 0 : i64, scratch_operands = 0 : i64, tpu.core_type = #tpu.core_type<tc>, window_params = [{transform_indices = @transform_0, window_bounds = array<i64: 2, 16, 256>}, {pipeline_mode = #tpu.pipeline_mode<synchronous>, transform_indices = @transform_1, window_bounds = array<i64: 8, 16>}, {pipeline_mode = #tpu.pipeline_mode<synchronous>, transform_indices = @transform_2, window_bounds = array<i64: 16, 8>}, {transform_indices = @transform_3, window_bounds = array<i64: 2, 16, 256>}]} {
    %c0 = arith.constant 0 : index
    %c0_0 = arith.constant 0 : index
    %c0_1 = arith.constant 0 : index
    %0 = vector.load %arg1[%c0, %c0_0, %c0_1] : memref<2x16x256xf32, #tpu.memory_space<vmem>>, vector<2x16x256xf32>
    %cst = arith.constant dense<0.000000e+00> : vector<2x16xf32>
    %1 = vector.multi_reduction <add>, %0, %cst [2] : vector<2x16x256xf32> to vector<2x16xf32>
    %cst_2 = arith.constant 3.906250e-03 : f32
    %2 = vector.broadcast %cst_2 : f32 to vector<2x16xf32>
    %3 = arith.mulf %1, %2 : vector<2x16xf32>
    %c0_3 = arith.constant 0 : index
    %c0_4 = arith.constant 0 : index
    %4 = vector.load %arg2[%c0_3, %c0_4] : memref<8x16xf32, #tpu.memory_space<vmem>>, vector<8x16xf32>
    "tpu.trace_start"() <{level = 10 : i32, message = "nc,sc->ns"}> : () -> ()
    %cst_5 = arith.constant dense<0.000000e+00> : vector<2x8xf32>
    %5 = tpu.matmul %3, %4, %cst_5 {dimension_numbers = #tpu.dot_dimension_numbers<[1], [1], [0], [0], [0, 0, 1, 0], [], []>} : vector<2x16xf32>, vector<8x16xf32>, vector<2x8xf32> -> vector<2x8xf32>
    "tpu.trace_stop"() : () -> ()
    %cst_6 = arith.constant 0.000000e+00 : f32
    %6 = vector.broadcast %cst_6 : f32 to vector<2x8xf32>
    %7 = arith.maximumf %5, %6 : vector<2x8xf32>
    %c0_7 = arith.constant 0 : index
    %c0_8 = arith.constant 0 : index
    %8 = vector.load %arg3[%c0_7, %c0_8] : memref<16x8xf32, #tpu.memory_space<vmem>>, vector<16x8xf32>
    "tpu.trace_start"() <{level = 10 : i32, message = "ns,cs->nc"}> : () -> ()
    %cst_9 = arith.constant dense<0.000000e+00> : vector<2x16xf32>
    %9 = tpu.matmul %7, %8, %cst_9 {dimension_numbers = #tpu.dot_dimension_numbers<[1], [1], [0], [0], [0, 0, 1, 0], [], []>} : vector<2x8xf32>, vector<16x8xf32>, vector<2x16xf32> -> vector<2x16xf32>
    "tpu.trace_stop"() : () -> ()
    %10 = arith.negf %9 : vector<2x16xf32>
    %11 = math.exp %10 : vector<2x16xf32>
    %cst_10 = arith.constant 1.000000e+00 : f32
    %12 = vector.broadcast %cst_10 : f32 to vector<2x16xf32>
    %13 = arith.addf %12, %11 : vector<2x16xf32>
    %14 = arith.divf %12, %13 : vector<2x16xf32>
    %15 = vector.shape_cast %14 : vector<2x16xf32> to vector<2x16x1xf32>
    %16 = vector.broadcast %15 : vector<2x16x1xf32> to vector<2x16x256xf32>
    %17 = arith.mulf %0, %16 : vector<2x16x256xf32>
    %c0_11 = arith.constant 0 : index
    %c0_12 = arith.constant 0 : index
    %c0_13 = arith.constant 0 : index
    %18 = vector.load %arg4[%c0_11, %c0_12, %c0_13] : memref<2x16x256xf32, #tpu.memory_space<vmem>>, vector<2x16x256xf32>
    tpu.vector_store %arg4[%c0_11, %c0_12, %c0_13], %17 {strides = array<i32>} : memref<2x16x256xf32, #tpu.memory_space<vmem>>, vector<2x16x256xf32>,
    return
  }
  func.func @transform_0(%arg0: i32) -> (i32, i32, i32) {
    %c0_i32 = arith.constant 0 : i32
    %c0_i32_0 = arith.constant 0 : i32
    %c0_i32_1 = arith.constant 0 : i32
    return %arg0, %c0_i32, %c0_i32_0 : i32, i32, i32
  }
  func.func @transform_1(%arg0: i32) -> (i32, i32) {
    %c0_i32 = arith.constant 0 : i32
    %c0_i32_0 = arith.constant 0 : i32
    %c0_i32_1 = arith.constant 0 : i32
    return %c0_i32, %c0_i32_0 : i32, i32
  }
  func.func @transform_2(%arg0: i32) -> (i32, i32) {
    %c0_i32 = arith.constant 0 : i32
    %c0_i32_0 = arith.constant 0 : i32
    %c0_i32_1 = arith.constant 0 : i32
    return %c0_i32, %c0_i32_0 : i32, i32
  }
  func.func @transform_3(%arg0: i32) -> (i32, i32, i32) {
    %c0_i32 = arith.constant 0 : i32
    %c0_i32_0 = arith.constant 0 : i32
    %c0_i32_1 = arith.constant 0 : i32
    return %arg0, %c0_i32, %c0_i32_0 : i32, i32, i32
  }
}

</mosaic_0001>

<llo_original>
// kernel: tpu_custom_call.1
$region0: #{tpu_custom_call.1}
  #allocation0 [shape = 'u32[]', space=smem, size = 0x4, offset = 0x4, fixed_abs, tag = 'smem constant byte address 0x4 - core index']
  #allocation1 [shape = 'u32[144,128]{1,0:T(1,128)}', space=vmem, size = 0x12000, scoped, tag = 'internal scratch']
  %s0 = inlined_call_operand.hbm [shape: f32[2,16,256], index: 0, kind: input, shape index: {}]
  %s1 = inlined_call_operand.vmem [shape: f32[8,16], index: 1, kind: input, shape index: {}]
  %s2 = inlined_call_operand.vmem [shape: f32[16,8], index: 2, kind: input, shape index: {}]
  %s3 = inlined_call_operand.hbm [shape: f32[2,16,256], index: 3, kind: output, shape index: {}]
  %s4 = sld [smem:[#allocation0]]
  $region26: #{tpu_custom_call.1} parent=0
    _
  %s6 = ssub.s32 1, %s4
  %s7 = scalar_select 0, %s6, %s4
  $region1: #{tpu_custom_call.1} parent=0
    #allocation2 [shape = 'u8[32768]{0}', space=vmem, size = 0x8000, scoped, tag = 'input window, operand 0, single buffered']
    #allocation3 [shape = 's32[1]{0}', space=sflag, size = 0x4, scoped, tag = 'scoped memory for tpu_custom_call.1']
    #allocation4 [shape = 's32[1]{0}', space=sflag, size = 0x4, scoped, tag = 'scoped memory for tpu_custom_call.1']
    #allocation5 [shape = 'u8[32768]{0}', space=vmem, size = 0x8000, scoped, tag = 'output window, operand 0, single buffered']
    %8 = vsyncpa [#allocation3], 0
    %9 = vsyncpa [#allocation4], 0
    // Predicated region
    $region2: #{tpu_custom_call.1} parent=1 // pred_check
      _
    $region3: #{tpu_custom_call.1} parent=1 // pred_check_branch
      %11 = sbr.rel (0) target = $region5
    $region4: #{tpu_custom_call.1} parent=1 // pred_region
      %s13 = ssub.s32 1024, 1024
      %14 = vsyncadd [#allocation3], %s13
      %s15 = sshll.u32 [#allocation2], 4
      %s16 = int_to_ptr.vmem [resolvable:$true] %s15
      %21 = dma.hbm_to_vmem [thread:$0]  %s0, 1024, %s16, [#allocation3], 256, 256, 16
    $region5: #{tpu_custom_call.1} parent=1 // pred_fallthru
      _
    // Predicated region
    $region6: #{tpu_custom_call.1} parent=1 // pred_check
      _
    $region7: #{tpu_custom_call.1} parent=1 // pred_check_branch
      %23 = sbr.rel (0) target = $region9
    $region8: #{tpu_custom_call.1} parent=1 // pred_region
      _
    $region9: #{tpu_custom_call.1} parent=1 // pred_fallthru
      _
    // Predicated region
    $region10: #{tpu_custom_call.1} parent=1 // pred_check
      _
    $region11: #{tpu_custom_call.1} parent=1 // pred_check_branch
      %25 = sbr.rel (0) target = $region13
    $region12: #{tpu_custom_call.1} parent=1 // pred_region
      _
    $region13: #{tpu_custom_call.1} parent=1 // pred_fallthru
      _
    // Predicated region
    $region14: #{tpu_custom_call.1} parent=1 // pred_check
      _
    $region15: #{tpu_custom_call.1} parent=1 // pred_check_branch
      %27 = sbr.rel (0) target = $region17
    $region16: #{tpu_custom_call.1} parent=1 // pred_region
      %28 = dma.done [#allocation3], 1024
    $region17: #{tpu_custom_call.1} parent=1 // pred_fallthru
      _
    %v29 = vld [vmem:[#allocation2] sm:$0xff]
    %v30 = vld [vmem:[#allocation2 + $0x8] sm:$0xff]
    %v31 = vld [vmem:[#allocation2 + $0x10] sm:$0xff]
    %v32 = vld [vmem:[#allocation2 + $0x18] sm:$0xff]
    %v33 = vld [vmem:[#allocation2 + $0x20] sm:$0xff]
    %v34 = vld [vmem:[#allocation2 + $0x28] sm:$0xff]
    %v35 = vld [vmem:[#allocation2 + $0x30] sm:$0xff]
    %v36 = vld [vmem:[#allocation2 + $0x38] sm:$0xff]
    %v37 = vadd.f32 %v29, %v30
    %38 = vadd.xlane.f32.xlu0 %v37
    %v39 = vpop.xlane.xlu0 %38
    %v40 = vadd.f32 %v31, %v32
    %41 = vadd.xlane.f32.xlu0 %v40
    %v42 = vpop.xlane.xlu0 %41
    %v43 = vadd.f32 %v33, %v34
    %44 = vadd.xlane.f32.xlu0 %v43
    %v45 = vpop.xlane.xlu0 %44
    %v46 = vadd.f32 %v35, %v36
    %47 = vadd.xlane.f32.xlu0 %v46
    %v48 = vpop.xlane.xlu0 %47
    %v49 = vmul.f32 %v39, 0.00390625
    %v50 = vmul.f32 %v42, 0.00390625
    %v51 = vmul.f32 %v45, 0.00390625
    %v52 = vmul.f32 %v48, 0.00390625
    %v53 = vld [vmem:[%s1] sm:$0xff]
    %v58 = vlaneseq
    %v59 = vand.u32 %v58, 127
    %v60 = vlaneseq
    %v61 = vshrl.u32 %v60, 7
    %v62 = vsub.s32 %v59, %v61
    %v63 = vrot.slane %v49, %v62
    %v64 = vadd.s32 %v59, 4294967288
    %v65 = vlaneseq
    %v66 = vshrl.u32 %v65, 7
    %v67 = vsub.s32 %v64, %v66
    %v68 = vrot.slane %v50, %v67
    %vm69 = vcmask 130112
    %v70 = vsel %vm69, %v68, %v63
    %v71 = vlaneseq
    %v72 = vshrl.u32 %v71, 7
    %v73 = vsub.s32 %v59, %v72
    %v74 = vrot.slane %v51, %v73
    %v75 = vlaneseq
    %v76 = vshrl.u32 %v75, 7
    %v77 = vsub.s32 %v64, %v76
    %v78 = vrot.slane %v52, %v77
    %v79 = vsel %vm69, %v78, %v74
    %vm80 = vcmask 1041409
    %v81 = vsel %vm80, %v79, %v70
    %vm82 = vcmask 130048
    %v83 = vsel %vm82, %v81, 0
    %v86 = vsel %vm82, %v53, 0
    %88 = vmatprep.subr.mxu0 0.0
    %89 = vmatpush1.xpose.msra.mxu0 0.0
    %90 = vmatprep.subr.mxu0 0.0
    %91 = vmatpush1.xpose.msra.mxu0 0.0
    %92 = vmatprep.subr.mxu0 0.0
    %93 = vmatpush1.xpose.msra.mxu0 0.0
    %94 = vmatprep.subr.mxu0 0.0
    %95 = vmatpush1.xpose.msra.mxu0 0.0
    %96 = vmatprep.subr.mxu0 0.0
    %97 = vmatpush1.xpose.msra.mxu0 0.0
    %98 = vmatprep.subr.mxu0 0.0
    %99 = vmatpush1.xpose.msra.mxu0 0.0
    %100 = vmatprep.subr.mxu0 0.0
    %101 = vmatpush1.xpose.msra.mxu0 0.0
    %102 = vmatprep.subr.mxu0 0.0
    %103 = vmatpush1.xpose.msra.mxu0 0.0
    %104 = vmatprep.subr.mxu0 0.0
    %105 = vmatpush1.xpose.msra.mxu0 0.0
    %106 = vmatprep.subr.mxu0 0.0
    %107 = vmatpush1.xpose.msra.mxu0 0.0
    %108 = vmatprep.subr.mxu0 0.0
    %109 = vmatpush1.xpose.msra.mxu0 0.0
    %110 = vmatprep.subr.mxu0 0.0
    %111 = vmatpush1.xpose.msra.mxu0 0.0
    %112 = vmatprep.subr.mxu0 0.0
    %113 = vmatpush1.xpose.msra.mxu0 0.0
    %114 = vmatprep.subr.mxu0 0.0
    %115 = vmatpush1.xpose.msra.mxu0 0.0
    %116 = vmatprep.subr.mxu0 0.0
    %117 = vmatpush1.xpose.msra.mxu0 0.0
    %118 = vmatprep.subr.mxu0 0.0
    %119 = vmatpush1.xpose.msra.mxu0 %v86
    %120 = vmatprep.subr.mxu0 0.0
    %121 = vmatpush2.xpose.msra.mxu0 0.0
    %122 = vmatprep.subr.mxu0 0.0
    %123 = vmatpush2.xpose.msra.mxu0 0.0
    %124 = vmatprep.subr.mxu0 0.0
    %125 = vmatpush2.xpose.msra.mxu0 0.0
    %126 = vmatprep.subr.mxu0 0.0
    %127 = vmatpush2.xpose.msra.mxu0 0.0
    %128 = vmatprep.subr.mxu0 0.0
    %129 = vmatpush2.xpose.msra.mxu0 0.0
    %130 = vmatprep.subr.mxu0 0.0
    %131 = vmatpush2.xpose.msra.mxu0 0.0
    %132 = vmatprep.subr.mxu0 0.0
    %133 = vmatpush2.xpose.msra.mxu0 0.0
    %134 = vmatprep.subr.mxu0 0.0
    %135 = vmatpush2.xpose.msra.mxu0 0.0
    %136 = vmatprep.subr.mxu0 0.0
    %137 = vmatpush2.xpose.msra.mxu0 0.0
    %138 = vmatprep.subr.mxu0 0.0
    %139 = vmatpush2.xpose.msra.mxu0 0.0
    %140 = vmatprep.subr.mxu0 0.0
    %141 = vmatpush2.xpose.msra.mxu0 0.0
    %142 = vmatprep.subr.mxu0 0.0
    %143 = vmatpush2.xpose.msra.mxu0 0.0
    %144 = vmatprep.subr.mxu0 0.0
    %145 = vmatpush2.xpose.msra.mxu0 0.0
    %146 = vmatprep.subr.mxu0 0.0
    %147 = vmatpush2.xpose.msra.mxu0 0.0
    %148 = vmatprep.subr.mxu0 0.0
    %149 = vmatpush2.xpose.msra.mxu0 0.0
    %150 = vmatprep.subr.mxu0 0.0
    %151 = vmatpush2.xpose.msra.mxu0 0.0
    %152 = vmatprep.mubr.f32.mxu0 0.0
    %153 = vmatmul.mubr.f32.gmra.mxu0 %v83
    %v154 = vpop.f32.mrf.mxu0
    %v155 = vadd.f32 0.0, %v154
    %v156 = vpop.f32.mrf.mxu0
    %157 = vdwg.mxu0
    %v158 = vmax.f32 %v155, 0.0
    %v159 = vld [vmem:[%s2] sm:$0xff]
    %v160 = vld [vmem:[%s2 + $0x8] sm:$0xff]
    %vm161 = vcmask 64512
    %v163 = vsel %vm161, %v158, 0
    %v166 = vsel %vm161, %v159, 0
    %v169 = vsel %vm161, %v160, 0
    %171 = vmatprep.subr.mxu0 0.0
    %172 = vmatpush1.xpose.msra.mxu0 0.0
    %173 = vmatprep.subr.mxu0 0.0
    %174 = vmatpush1.xpose.msra.mxu0 0.0
    %175 = vmatprep.subr.mxu0 0.0
    %176 = vmatpush1.xpose.msra.mxu0 0.0
    %177 = vmatprep.subr.mxu0 0.0
    %178 = vmatpush1.xpose.msra.mxu0 0.0
    %179 = vmatprep.subr.mxu0 0.0
    %180 = vmatpush1.xpose.msra.mxu0 0.0
    %181 = vmatprep.subr.mxu0 0.0
    %182 = vmatpush1.xpose.msra.mxu0 0.0
    %183 = vmatprep.subr.mxu0 0.0
    %184 = vmatpush1.xpose.msra.mxu0 0.0
    %185 = vmatprep.subr.mxu0 0.0
    %186 = vmatpush1.xpose.msra.mxu0 0.0
    %187 = vmatprep.subr.mxu0 0.0
    %188 = vmatpush1.xpose.msra.mxu0 0.0
    %189 = vmatprep.subr.mxu0 0.0
    %190 = vmatpush1.xpose.msra.mxu0 0.0
    %191 = vmatprep.subr.mxu0 0.0
    %192 = vmatpush1.xpose.msra.mxu0 0.0
    %193 = vmatprep.subr.mxu0 0.0
    %194 = vmatpush1.xpose.msra.mxu0 0.0
    %195 = vmatprep.subr.mxu0 0.0
    %196 = vmatpush1.xpose.msra.mxu0 0.0
    %197 = vmatprep.subr.mxu0 0.0
    %198 = vmatpush1.xpose.msra.mxu0 0.0
    %199 = vmatprep.subr.mxu0 0.0
    %200 = vmatpush1.xpose.msra.mxu0 %v169
    %201 = vmatprep.subr.mxu0 0.0
    %202 = vmatpush1.xpose.msra.mxu0 %v166
    %203 = vmatprep.subr.mxu0 0.0
    %204 = vmatpush2.xpose.msra.mxu0 0.0
    %205 = vmatprep.subr.mxu0 0.0
    %206 = vmatpush2.xpose.msra.mxu0 0.0
    %207 = vmatprep.subr.mxu0 0.0
    %208 = vmatpush2.xpose.msra.mxu0 0.0
    %209 = vmatprep.subr.mxu0 0.0
    %210 = vmatpush2.xpose.msra.mxu0 0.0
    %211 = vmatprep.subr.mxu0 0.0
    %212 = vmatpush2.xpose.msra.mxu0 0.0
    %213 = vmatprep.subr.mxu0 0.0
    %214 = vmatpush2.xpose.msra.mxu0 0.0
    %215 = vmatprep.subr.mxu0 0.0
    %216 = vmatpush2.xpose.msra.mxu0 0.0
    %217 = vmatprep.subr.mxu0 0.0
    %218 = vmatpush2.xpose.msra.mxu0 0.0
    %219 = vmatprep.subr.mxu0 0.0
    %220 = vmatpush2.xpose.msra.mxu0 0.0
    %221 = vmatprep.subr.mxu0 0.0
    %222 = vmatpush2.xpose.msra.mxu0 0.0
    %223 = vmatprep.subr.mxu0 0.0
    %224 = vmatpush2.xpose.msra.mxu0 0.0
    %225 = vmatprep.subr.mxu0 0.0
    %226 = vmatpush2.xpose.msra.mxu0 0.0
    %227 = vmatprep.subr.mxu0 0.0
    %228 = vmatpush2.xpose.msra.mxu0 0.0
    %229 = vmatprep.subr.mxu0 0.0
    %230 = vmatpush2.xpose.msra.mxu0 0.0
    %231 = vmatprep.subr.mxu0 0.0
    %232 = vmatpush2.xpose.msra.mxu0 0.0
    %233 = vmatprep.subr.mxu0 0.0
    %234 = vmatpush2.xpose.msra.mxu0 0.0
    %235 = vmatprep.mubr.f32.mxu0 0.0
    %236 = vmatmul.mubr.f32.gmra.mxu0 %v163
    %v237 = vpop.f32.mrf.mxu0
    %v238 = vadd.f32 0.0, %v237
    %v239 = vpop.f32.mrf.mxu0
    %240 = vdwg.mxu0
    %v241 = vxor.u32 %v238, 2147483648
    %v242 = vmul.f32 %v241, 1.442695
    %v243 = vpow.pop %v242
    %v244 = vadd.f32 %v243, 1.0
    %v245 = vrcp.pop %v244
    %v246 = vmul.f32 1.0, %v245
    %v247 = vlaneseq
    %v248 = vshrl.u32 %v247, 7
    %v249 = vsub.s32 0, %v248
    %v250 = vrot.slane %v246, %v249
    %252 = vbcast.lane.b32.xlu0 %v250, 256
    %v253 = vpop.permute.xlu0 %252
    %s255 = sor.u32 256, 8
    %256 = vbcast.lane.b32.xlu0 %v250, %s255
    %v257 = vpop.permute.xlu0 %256
    %v258 = vlaneseq
    %v259 = vshrl.u32 %v258, 7
    %v260 = vsub.s32 1, %v259
    %v261 = vrot.slane %v246, %v260
    %263 = vbcast.lane.b32.xlu0 %v261, 256
    %v264 = vpop.permute.xlu0 %263
    %s266 = sor.u32 256, 8
    %267 = vbcast.lane.b32.xlu0 %v261, %s266
    %v268 = vpop.permute.xlu0 %267
    %v269 = vmul.f32 %v29, %v253
    %v270 = vmul.f32 %v30, %v253
    %v271 = vmul.f32 %v31, %v257
    %v272 = vmul.f32 %v32, %v257
    %v273 = vmul.f32 %v33, %v264
    %v274 = vmul.f32 %v34, %v264
    %v275 = vmul.f32 %v35, %v268
    %v276 = vmul.f32 %v36, %v268
    %277 = vst [vmem:[#allocation5] sm:$0xff] %v269
    %278 = vst [vmem:[#allocation5 + $0x8] sm:$0xff] %v270
    %279 = vst [vmem:[#allocation5 + $0x10] sm:$0xff] %v271
    %280 = vst [vmem:[#allocation5 + $0x18] sm:$0xff] %v272
    %281 = vst [vmem:[#allocation5 + $0x20] sm:$0xff] %v273
    %282 = vst [vmem:[#allocation5 + $0x28] sm:$0xff] %v274
    %283 = vst [vmem:[#allocation5 + $0x30] sm:$0xff] %v275
    %284 = vst [vmem:[#allocation5 + $0x38] sm:$0xff] %v276
    // Predicated region
    $region18: #{tpu_custom_call.1} parent=1 // pred_check
      _
    $region19: #{tpu_custom_call.1} parent=1 // pred_check_branch
      %286 = sbr.rel (0) target = $region21
    $region20: #{tpu_custom_call.1} parent=1 // pred_region
      %s288 = ssub.s32 1024, 1024
      %289 = vsyncadd [#allocation4], %s288
      %s290 = sshll.u32 [#allocation5], 4
      %s291 = int_to_ptr.vmem [resolvable:$true] %s290
      %296 = dma.vmem_to_hbm [thread:$0]  %s291, 1024, %s3, [#allocation4], 256, 256, 16
    $region21: #{tpu_custom_call.1} parent=1 // pred_fallthru
      _
    // Predicated region
    $region22: #{tpu_custom_call.1} parent=1 // pred_check
      _
    $region23: #{tpu_custom_call.1} parent=1 // pred_check_branch
      %298 = sbr.rel (0) target = $region25
    $region24: #{tpu_custom_call.1} parent=1 // pred_region
      %299 = dma.done [#allocation4], 1024
    $region25: #{tpu_custom_call.1} parent=1 // pred_fallthru
      _
    %300 = vsyncpa [#allocation3], 1
    %301 = vsyncpa [#allocation4], 1

</llo_original>
